<compile_context>
chip_gen: v7x
topology: tpu7x:2x2x1
jax: 0.10.0
libtpu: 0.0.40
codegen_flags: <defaults>
</compile_context>

<pallas_src>
import functools
import math

import jax
import jax.numpy as jnp
from jax.experimental import pallas as pl
from jax.experimental.pallas import tpu as pltpu

_STD_MIN = 1e-8
_STD_MAX = 1e8
_LOG_STD_MIN = math.log(_STD_MIN)
_LOG_STD_MAX = math.log(_STD_MAX)
_LOG_2PI = math.log(2.0 * math.pi)
_MAX_TILE_B = 512


def _batch_tile(batch):
    """Largest batch tile <= 512 (multiple of 128 when actually tiling) dividing batch."""
    if batch <= _MAX_TILE_B:
        return batch
    for tb in range(_MAX_TILE_B, 0, -128):
        if batch % tb == 0:
            return tb
    return batch  # fall back to a single tile


# ----------------------------------------------------------------------------
# Kernel 1 (demo encoder_net): linear layer  h = x @ W + b  on the MXU.
# ----------------------------------------------------------------------------
def _linear_kernel(x_ref, w_ref, b_ref, h_ref):
    h_ref[...] = (
        jnp.dot(x_ref[...], w_ref[...], preferred_element_type=jnp.float32)
        + b_ref[...]
    )


def linear_encoder_apply(x, w, b):
    batch, feat = x.shape
    out_dim = w.shape[1]
    tb = _batch_tile(batch)
    return pl.pallas_call(
        _linear_kernel,
        out_shape=jax.ShapeDtypeStruct((batch, out_dim), jnp.float32),
        grid=(batch // tb,),
        in_specs=[
            pl.BlockSpec((tb, feat), lambda i: (i, 0)),
            pl.BlockSpec((feat, out_dim), lambda i: (0, 0)),
            pl.BlockSpec((1, out_dim), lambda i: (0, 0)),
        ],
        out_specs=pl.BlockSpec((tb, out_dim), lambda i: (i, 0)),
        compiler_params=pltpu.CompilerParams(dimension_semantics=("parallel",)),
    )(x, w, b)


# ----------------------------------------------------------------------------
# Kernel 2: parameter transform  std = clamp(exp(0.5 * var), 1e-8, 1e8)
# (the NormalEncoder.forward() scale computation), tiled over batch.
# ----------------------------------------------------------------------------
def _std_kernel(var_ref, std_ref):
    std_ref[...] = jnp.clip(jnp.exp(0.5 * var_ref[...]), _STD_MIN, _STD_MAX)


def compute_std(var):
    batch, d_z = var.shape
    tb = _batch_tile(batch)
    return pl.pallas_call(
        _std_kernel,
        out_shape=jax.ShapeDtypeStruct((batch, d_z), jnp.float32),
        grid=(batch // tb,),
        in_specs=[pl.BlockSpec((tb, d_z), lambda i: (i, 0))],
        out_specs=pl.BlockSpec((tb, d_z), lambda i: (i, 0)),
        compiler_params=pltpu.CompilerParams(dimension_semantics=("parallel",)),
    )(var)


# ----------------------------------------------------------------------------
# Kernel 3: fused Independent(Normal).log_prob
#   Inputs are presented transposed (d_z on sublanes, batch on lanes):
#     zT, muT, varT : (d_z, B) tiles of (d_z, TB)
#   Output is lane-dense: (1, B), reshaped to (B,) in the wrapper.
#   The std transform is re-derived in-kernel from `var` without divides or logs.
# ----------------------------------------------------------------------------
def _logprob_kernel(z_ref, mu_ref, var_ref, out_ref, *, d_z):
    z = z_ref[...]                       # (d_z, TB)
    mu = mu_ref[...]                     # (d_z, TB)
    half_var = 0.5 * var_ref[...]        # (d_z, TB)

    # exact equivalents of 1/std and log(std) for std = clip(exp(half_var), 1e-8, 1e8)
    inv_std = jnp.clip(jnp.exp(-half_var), _STD_MIN, _STD_MAX)      # VPU mul later
    log_std = jnp.clip(half_var, _LOG_STD_MIN, _LOG_STD_MAX)        # no per-elem log

    y = (z - mu) * inv_std
    # sublane reduction -> naturally lane-major (1, TB) result
    lp = jnp.sum(-0.5 * y * y - log_std, axis=0, keepdims=True)
    out_ref[...] = lp - 0.5 * d_z * _LOG_2PI


def diag_normal_log_prob(z, mu, var):
    batch, d_z = z.shape
    tb = _batch_tile(batch)
    # Wrapper-side transpose = layout plumbing: batch moves to the lane axis so the
    # kernel's vregs are fully used for small d_z and the output store is lane-dense.
    z_t, mu_t, var_t = z.T, mu.T, var.T               # (d_z, B) each
    out = pl.pallas_call(
        functools.partial(_logprob_kernel, d_z=d_z),
        out_shape=jax.ShapeDtypeStruct((1, batch), jnp.float32),
        grid=(batch // tb,),
        in_specs=[
            pl.BlockSpec((d_z, tb), lambda i: (0, i)),
            pl.BlockSpec((d_z, tb), lambda i: (0, i)),
            pl.BlockSpec((d_z, tb), lambda i: (0, i)),
        ],
        out_specs=pl.BlockSpec((1, tb), lambda i: (0, i)),
        compiler_params=pltpu.CompilerParams(dimension_semantics=("parallel",)),
    )(z_t, mu_t, var_t)
    return out[0]


# ----------------------------------------------------------------------------
# Module-level wrappers matching the PyTorch NormalEncoder semantics.
# ----------------------------------------------------------------------------
class DiagonalNormalPallas:
    """Stand-in for td.Independent(td.Normal(mu, std), 1)."""

    def __init__(self, mu, std, var):
        self.mean = mu
        self.stddev = std
        self._var = var  # pre-activation; log_prob re-derives 1/std, log(std) in-kernel

    def log_prob(self, z):
        return diag_normal_log_prob(z, self.mean, self._var)

    # TODO(synk): rsample() (reparameterized sampling) not kernelized; it is RNG glue
    # and would use pltpu.prng_seed / pltpu.prng_random_bits if needed.


class NormalEncoderPallas:
    def __init__(self, encoder_apply):
        # encoder_apply: arbitrary JAX callable (batch, features) -> (batch, 2*d_z)
        # TODO(synk): arbitrary encoder nets are not kernelized; the demo supplies a
        # Pallas linear encoder (linear_encoder_apply).
        self.encoder_apply = encoder_apply

    def forward(self, x):
        h = self.encoder_apply(x)                 # (B, 2*d_z)
        d_z = h.shape[-1] // 2
        mu, var = h[:, :d_z], h[:, d_z:]          # torch.chunk(h, 2, dim=-1)
        std = compute_std(var)                    # Pallas kernel
        return DiagonalNormalPallas(mu, std, var)


# ----------------------------------------------------------------------------
# Demo + correctness check against a pure-JAX reference.
# ----------------------------------------------------------------------------
if __name__ == "__main__":
    batch, feat, d_z = 8, 16, 32
    key = jax.random.PRNGKey(0)
    kx, kw, kb, kz = jax.random.split(key, 4)
    x = jax.random.normal(kx, (batch, feat), jnp.float32)
    w = jax.random.normal(kw, (feat, 2 * d_z), jnp.float32) * 0.1
    b = jax.random.normal(kb, (1, 2 * d_z), jnp.float32) * 0.1

    encoder = NormalEncoderPallas(lambda inp: linear_encoder_apply(inp, w, b))
    dist = encoder.forward(x)
    mu = jax.block_until_ready(dist.mean)
    std = jax.block_until_ready(dist.stddev)

    z = jax.random.normal(kz, (batch, d_z), jnp.float32)
    lp = jax.block_until_ready(dist.log_prob(z))

    # pure-JAX reference (direct translation of the torch module + td.Independent)
    h_ref = x @ w + b
    mu_ref, var_ref_ = jnp.split(h_ref, 2, axis=-1)
    std_ref = jnp.clip(jnp.exp(0.5 * var_ref_), 1e-8, 1e8)
    lp_ref = jnp.sum(
        -0.5 * ((z - mu_ref) / std_ref) ** 2 - jnp.log(std_ref) - 0.5 * jnp.log(2 * jnp.pi),
        axis=-1,
    )

    assert mu.shape == (batch, d_z) and std.shape == (batch, d_z) and lp.shape == (batch,)
    assert jnp.allclose(mu, mu_ref, rtol=1e-5, atol=1e-5), "mu mismatch"
    assert jnp.allclose(std, std_ref, rtol=1e-5, atol=1e-5), "std mismatch"
    assert jnp.allclose(lp, lp_ref, rtol=1e-4, atol=1e-4), "log_prob mismatch"
    print("KERNEL_OK")
</pallas_src>

<mosaic_0001>
module attributes {stable_mosaic.version = 11 : i64} {
  func.func @_linear_kernel(%arg0: i32, %arg1: memref<8x16xf32, #tpu.memory_space<vmem>>, %arg2: memref<16x64xf32, #tpu.memory_space<vmem>>, %arg3: memref<1x64xf32, #tpu.memory_space<vmem>>, %arg4: memref<8x64xf32, #tpu.memory_space<vmem>>) attributes {dimension_semantics = [#tpu.dimension_semantics<parallel>], iteration_bounds = array<i64: 1>, scalar_prefetch = 0 : i64, scratch_operands = 0 : i64, tpu.core_type = #tpu.core_type<tc>, window_params = [{transform_indices = @transform_0, window_bounds = array<i64: 8, 16>}, {pipeline_mode = #tpu.pipeline_mode<synchronous>, transform_indices = @transform_1, window_bounds = array<i64: 16, 64>}, {pipeline_mode = #tpu.pipeline_mode<synchronous>, transform_indices = @transform_2, window_bounds = array<i64: 1, 64>}, {transform_indices = @transform_3, window_bounds = array<i64: 8, 64>}]} {
    %c0 = arith.constant 0 : index
    %c0_0 = arith.constant 0 : index
    %0 = vector.load %arg1[%c0, %c0_0] : memref<8x16xf32, #tpu.memory_space<vmem>>, vector<8x16xf32>
    %c0_1 = arith.constant 0 : index
    %c0_2 = arith.constant 0 : index
    %1 = vector.load %arg2[%c0_1, %c0_2] : memref<16x64xf32, #tpu.memory_space<vmem>>, vector<16x64xf32>
    %cst = arith.constant dense<0.000000e+00> : vector<8x64xf32>
    %2 = tpu.matmul %0, %1, %cst {dimension_numbers = #tpu.dot_dimension_numbers<[1], [0], [0], [1], [0, 0, 1, 1], [], []>} : vector<8x16xf32>, vector<16x64xf32>, vector<8x64xf32> -> vector<8x64xf32>
    %c0_3 = arith.constant 0 : index
    %c0_4 = arith.constant 0 : index
    %3 = vector.load %arg3[%c0_3, %c0_4] : memref<1x64xf32, #tpu.memory_space<vmem>>, vector<1x64xf32>
    %4 = vector.broadcast %3 : vector<1x64xf32> to vector<8x64xf32>
    %5 = arith.addf %2, %4 : vector<8x64xf32>
    %c0_5 = arith.constant 0 : index
    %c0_6 = arith.constant 0 : index
    %6 = vector.load %arg4[%c0_5, %c0_6] : memref<8x64xf32, #tpu.memory_space<vmem>>, vector<8x64xf32>
    tpu.vector_store %arg4[%c0_5, %c0_6], %5 {strides = array<i32>} : memref<8x64xf32, #tpu.memory_space<vmem>>, vector<8x64xf32>,
    return
  }
  func.func @transform_0(%arg0: i32) -> (i32, i32) {
    %c0_i32 = arith.constant 0 : i32
    %c0_i32_0 = arith.constant 0 : i32
    return %arg0, %c0_i32 : i32, i32
  }
  func.func @transform_1(%arg0: i32) -> (i32, i32) {
    %c0_i32 = arith.constant 0 : i32
    %c0_i32_0 = arith.constant 0 : i32
    %c0_i32_1 = arith.constant 0 : i32
    return %c0_i32, %c0_i32_0 : i32, i32
  }
  func.func @transform_2(%arg0: i32) -> (i32, i32) {
    %c0_i32 = arith.constant 0 : i32
    %c0_i32_0 = arith.constant 0 : i32
    %c0_i32_1 = arith.constant 0 : i32
    return %c0_i32, %c0_i32_0 : i32, i32
  }
  func.func @transform_3(%arg0: i32) -> (i32, i32) {
    %c0_i32 = arith.constant 0 : i32
    %c0_i32_0 = arith.constant 0 : i32
    return %arg0, %c0_i32 : i32, i32
  }
}

</mosaic_0001>

<llo_original>
// kernel: tpu_custom_call.1
$region0: #{tpu_custom_call.1}
  #allocation0 [shape = 'u32[]', space=smem, size = 0x4, offset = 0x4, fixed_abs, tag = 'smem constant byte address 0x4 - core index']
  #allocation1 [shape = 'u32[144,128]{1,0:T(1,128)}', space=vmem, size = 0x12000, scoped, tag = 'internal scratch']
  %s0 = inlined_call_operand.hbm [shape: f32[8,16], index: 0, kind: input, shape index: {}]
  %s1 = inlined_call_operand.hbm [shape: f32[16,64], index: 1, kind: input, shape index: {}]
  %s2 = inlined_call_operand.vmem [shape: f32[1,64], index: 2, kind: input, shape index: {}]
  %s3 = inlined_call_operand.hbm [shape: f32[8,64], index: 3, kind: output, shape index: {}]
  %s4 = sld [smem:[#allocation0]]
  $region30: #{tpu_custom_call.1} parent=0
    _
  %s6 = ssub.s32 1, %s4
  %s7 = scalar_select 0, %s6, %s4
  $region1: #{tpu_custom_call.1} parent=0
    #allocation2 [shape = 'u8[4096]{0}', space=vmem, size = 0x1000, scoped, tag = 'input window, operand 0, single buffered']
    #allocation3 [shape = 's32[1]{0}', space=sflag, size = 0x4, scoped, tag = 'scoped memory for tpu_custom_call.1']
    #allocation4 [shape = 's32[1]{0}', space=sflag, size = 0x4, scoped, tag = 'scoped memory for tpu_custom_call.1']
    #allocation5 [shape = 'u8[8192]{0}', space=vmem, size = 0x2000, scoped, tag = 'input window, operand 1, single buffered']
    #allocation6 [shape = 's32[1]{0}', space=sflag, size = 0x4, scoped, tag = 'scoped memory for tpu_custom_call.1']
    #allocation7 [shape = 'u8[4096]{0}', space=vmem, size = 0x1000, scoped, tag = 'output window, operand 0, single buffered']
    %8 = vsyncpa [#allocation3], 0
    %9 = vsyncpa [#allocation6], 0
    %10 = vsyncpa [#allocation4], 0
    // Predicated region
    $region2: #{tpu_custom_call.1} parent=1 // pred_check
      _
    $region3: #{tpu_custom_call.1} parent=1 // pred_check_branch
      %12 = sbr.rel (0) target = $region5
    $region4: #{tpu_custom_call.1} parent=1 // pred_region
      %s14 = ssub.s32 128, 128
      %15 = vsyncadd [#allocation3], %s14
      %s17 = sshll.u32 [#allocation2], 4
      %s18 = int_to_ptr.vmem [resolvable:$true] %s17
      %20 = dma.hbm_to_vmem [thread:$0]  %s0, 128, %s18, [#allocation3]
    $region5: #{tpu_custom_call.1} parent=1 // pred_fallthru
      _
    // Predicated region
    $region6: #{tpu_custom_call.1} parent=1 // pred_check
      _
    $region7: #{tpu_custom_call.1} parent=1 // pred_check_branch
      %22 = sbr.rel (0) target = $region9
    $region8: #{tpu_custom_call.1} parent=1 // pred_region
      %s24 = ssub.s32 256, 256
      %25 = vsyncadd [#allocation6], %s24
      %s26 = sshll.u32 [#allocation5], 4
      %s27 = int_to_ptr.vmem [resolvable:$true] %s26
      %32 = dma.hbm_to_vmem [thread:$0]  %s1, 256, %s27, [#allocation6], 128, 128, 8
    $region9: #{tpu_custom_call.1} parent=1 // pred_fallthru
      _
    // Predicated region
    $region10: #{tpu_custom_call.1} parent=1 // pred_check
      _
    $region11: #{tpu_custom_call.1} parent=1 // pred_check_branch
      %34 = sbr.rel (0) target = $region13
    $region12: #{tpu_custom_call.1} parent=1 // pred_region
      _
    $region13: #{tpu_custom_call.1} parent=1 // pred_fallthru
      _
    // Predicated region
    $region14: #{tpu_custom_call.1} parent=1 // pred_check
      _
    $region15: #{tpu_custom_call.1} parent=1 // pred_check_branch
      %36 = sbr.rel (0) target = $region17
    $region16: #{tpu_custom_call.1} parent=1 // pred_region
      %37 = dma.done [#allocation3], 128
    $region17: #{tpu_custom_call.1} parent=1 // pred_fallthru
      _
    // Predicated region
    $region18: #{tpu_custom_call.1} parent=1 // pred_check
      _
    $region19: #{tpu_custom_call.1} parent=1 // pred_check_branch
      %39 = sbr.rel (0) target = $region21
    $region20: #{tpu_custom_call.1} parent=1 // pred_region
      %40 = dma.done [#allocation6], 256
    $region21: #{tpu_custom_call.1} parent=1 // pred_fallthru
      _
    %v41 = vld [vmem:[#allocation2] sm:$0xff]
    %v42 = vld [vmem:[#allocation5] sm:$0xff]
    %v43 = vld [vmem:[#allocation5 + $0x8] sm:$0xff]
    %v44 = vld [vmem:[%s2] sm:$0x1]
    %v46 = vlaneseq
    %v47 = vshrl.u32 %v46, 7
    %v48 = vsub.s32 0, %v47
    %v49 = vrot.slane %v44, %v48
    %vm51 = vcmask 130048
    %v53 = vsel %vm51, %v41, 0
    %55 = vmatprep.subr.mxu0 0.0
    %56 = vmatpush1.msra.mxu0 %v42
    %57 = vmatprep.subr.mxu0 0.0
    %58 = vmatpush1.msra.mxu0 %v43
    %59 = vmatprep.subr.mxu0 0.0
    %60 = vmatpush1.msra.mxu0 0.0
    %61 = vmatprep.subr.mxu0 0.0
    %62 = vmatpush1.msra.mxu0 0.0
    %63 = vmatprep.subr.mxu0 0.0
    %64 = vmatpush1.msra.mxu0 0.0
    %65 = vmatprep.subr.mxu0 0.0
    %66 = vmatpush1.msra.mxu0 0.0
    %67 = vmatprep.subr.mxu0 0.0
    %68 = vmatpush1.msra.mxu0 0.0
    %69 = vmatprep.subr.mxu0 0.0
    %70 = vmatpush1.msra.mxu0 0.0
    %71 = vmatprep.subr.mxu0 0.0
    %72 = vmatpush1.msra.mxu0 0.0
    %73 = vmatprep.subr.mxu0 0.0
    %74 = vmatpush1.msra.mxu0 0.0
    %75 = vmatprep.subr.mxu0 0.0
    %76 = vmatpush1.msra.mxu0 0.0
    %77 = vmatprep.subr.mxu0 0.0
    %78 = vmatpush1.msra.mxu0 0.0
    %79 = vmatprep.subr.mxu0 0.0
    %80 = vmatpush1.msra.mxu0 0.0
    %81 = vmatprep.subr.mxu0 0.0
    %82 = vmatpush1.msra.mxu0 0.0
    %83 = vmatprep.subr.mxu0 0.0
    %84 = vmatpush1.msra.mxu0 0.0
    %85 = vmatprep.subr.mxu0 0.0
    %86 = vmatpush1.msra.mxu0 0.0
    %87 = vmatprep.subr.mxu0 0.0
    %88 = vmatpush1.msra.mxu0 0.0
    %89 = vmatprep.subr.mxu0 0.0
    %90 = vmatpush1.msra.mxu0 0.0
    %91 = vmatprep.subr.mxu0 0.0
    %92 = vmatpush1.msra.mxu0 0.0
    %93 = vmatprep.subr.mxu0 0.0
    %94 = vmatpush1.msra.mxu0 0.0
    %95 = vmatprep.subr.mxu0 0.0
    %96 = vmatpush1.msra.mxu0 0.0
    %97 = vmatprep.subr.mxu0 0.0
    %98 = vmatpush1.msra.mxu0 0.0
    %99 = vmatprep.subr.mxu0 0.0
    %100 = vmatpush1.msra.mxu0 0.0
    %101 = vmatprep.subr.mxu0 0.0
    %102 = vmatpush1.msra.mxu0 0.0
    %103 = vmatprep.subr.mxu0 0.0
    %104 = vmatpush1.msra.mxu0 0.0
    %105 = vmatprep.subr.mxu0 0.0
    %106 = vmatpush1.msra.mxu0 0.0
    %107 = vmatprep.subr.mxu0 0.0
    %108 = vmatpush1.msra.mxu0 0.0
    %109 = vmatprep.subr.mxu0 0.0
    %110 = vmatpush1.msra.mxu0 0.0
    %111 = vmatprep.subr.mxu0 0.0
    %112 = vmatpush1.msra.mxu0 0.0
    %113 = vmatprep.subr.mxu0 0.0
    %114 = vmatpush1.msra.mxu0 0.0
    %115 = vmatprep.subr.mxu0 0.0
    %116 = vmatpush1.msra.mxu0 0.0
    %117 = vmatprep.subr.mxu0 0.0
    %118 = vmatpush1.msra.mxu0 0.0
    %119 = vmatprep.mubr.f32.mxu0 0.0
    %120 = vmatmul.mubr.f32.gmra.mrb[0].mxu0 %v53
    %v121 = vpop.f32.mrb[0].mxu0
    %v122 = vadd.f32 %v49, %v121
    %v123 = vpop.f32.mrb[0].mxu0
    %124 = vdwg.mxu0
    %vm125 = vcmask 523264
    %126 = vst.msk [vmem:[#allocation7] sm:$0xff] %vm125, %v122
    // Predicated region
    $region22: #{tpu_custom_call.1} parent=1 // pred_check
      _
    $region23: #{tpu_custom_call.1} parent=1 // pred_check_branch
      %128 = sbr.rel (0) target = $region25
    $region24: #{tpu_custom_call.1} parent=1 // pred_region
      %s130 = ssub.s32 128, 128
      %131 = vsyncadd [#allocation4], %s130
      %s133 = sshll.u32 [#allocation7], 4
      %s134 = int_to_ptr.vmem [resolvable:$true] %s133
      %136 = dma.vmem_to_hbm [thread:$0]  %s134, 128, %s3, [#allocation4]
    $region25: #{tpu_custom_call.1} parent=1 // pred_fallthru
      _
    // Predicated region
    $region26: #{tpu_custom_call.1} parent=1 // pred_check
      _
    $region27: #{tpu_custom_call.1} parent=1 // pred_check_branch
      %138 = sbr.rel (0) target = $region29
    $region28: #{tpu_custom_call.1} parent=1 // pred_region
      %139 = dma.done [#allocation4], 128
    $region29: #{tpu_custom_call.1} parent=1 // pred_fallthru
      _
    %140 = vsyncpa [#allocation3], 1
    %141 = vsyncpa [#allocation6], 1
    %142 = vsyncpa [#allocation4], 1

</llo_original>
